<compile_context>
chip_gen: v6e
topology: v6e:2x2x1
jax: 0.10.0
libtpu: 0.0.40
codegen_flags: <defaults>
</compile_context>

<pallas_src>
import functools
import math

import jax
import jax.numpy as jnp
from jax import lax
from jax.experimental import pallas as pl
from jax.experimental.pallas import tpu as pltpu

EPS = 1e-12  # F.normalize default eps (clamp: x / max(||x||, eps))


def _normalized_linear_kernel(x_ref, w_ref, inv_x_ref, inv_w_ref, o_ref, acc_ref,
                              *, precision):
    # grid = (j over Fout tiles, i over B tiles, k over Fin tiles); k innermost.
    k = pl.program_id(2)

    @pl.when(k == 0)
    def _init():
        acc_ref[...] = jnp.zeros_like(acc_ref)

    # Raw partial matmul on the MXU: contract the last (lane) axis of BOTH operands,
    # so no explicit W transpose / relayout is needed before the MXU push.
    acc_ref[...] += lax.dot_general(
        x_ref[...], w_ref[...], (((1,), (1,)), ((), ())),
        preferred_element_type=jnp.float32, precision=precision)

    @pl.when(k == pl.num_programs(2) - 1)
    def _finalize():
        # Normalize exactly once: out = (x @ W^T) * (1/||x||) * (1/||W||).
        o_ref[...] = (acc_ref[...] * inv_x_ref[...] * inv_w_ref[...]).astype(o_ref.dtype)


def _round_up(v, m):
    return ((v + m - 1) // m) * m


def _split_tile(total, cap, align):
    """Largest aligned tile <= cap that splits `total` with minimal padding."""
    total_a = _round_up(max(int(total), 1), align)
    n = -(-total_a // cap)                 # number of tiles needed at this cap
    return _round_up(-(-total_a // n), align)


def _vmem_limit_bytes():
    # ~3/4 of physical VMEM: 48 MiB on v7x (64 MiB), 96 MiB on v5e/v6e (128 MiB).
    cap = 64 * 1024 * 1024                 # conservative fallback (smallest = v7x)
    try:
        cap = int(pltpu.get_tpu_info().vmem_capacity_bytes)
    except Exception:
        pass
    return min((cap * 3) // 4, 112 * 1024 * 1024)


def _pick_tiles(B, Fout, Fin, in_itemsize, out_itemsize, tile_budget):
    """Pick the largest (tm, tn, tk) that fit the VMEM tile budget (double-buffered)."""
    tm = _split_tile(B, 512, 8)

    def vmem_est(tn, tk):
        return (2 * tm * tk * in_itemsize        # x tiles (double-buffered)
                + 2 * tn * tk * in_itemsize      # W tiles (double-buffered)
                + tm * tn * 4                    # f32 accumulator scratch
                + 2 * tm * tn * out_itemsize     # output tiles (double-buffered)
                + 2 * (tm + tn) * 4)             # inv_x / inv_w tiles

    for tn_cap in (2048, 1024, 512, 256, 128):       # prefer big tn (cuts x re-reads)
        for tk_cap in (2048, 1024, 512, 256, 128):   # then big tk (per-step overhead)
            tn = _split_tile(Fout, tn_cap, 128)
            tk = _split_tile(Fin, tk_cap, 128)
            if vmem_est(tn, tk) <= tile_budget:
                return tm, tn, tk
    return tm, 128, 128


@functools.partial(jax.jit, static_argnames=("tm", "tn", "tk", "precision"))
def normalized_linear(x, w, *, tm=None, tn=None, tk=None, precision=None):
    """x: (B, in_features), w: (out_features, in_features) -> (B, out_features)."""
    B, Fin = x.shape
    Fout, Fin_w = w.shape
    assert Fin == Fin_w, "in_features mismatch"
    out_dtype = x.dtype  # output dtype follows the input (f32 accumulator inside)

    vmem_limit = _vmem_limit_bytes()
    if tm is None or tn is None or tk is None:
        atm, atn, atk = _pick_tiles(B, Fout, Fin,
                                    x.dtype.itemsize, jnp.dtype(out_dtype).itemsize,
                                    int(vmem_limit * 0.8))
        tm = atm if tm is None else tm
        tn = atn if tn is None else tn
        tk = atk if tk is None else tk

    # --- Row-norm prologue (hoisted out of the hot loop; one cheap f32 pass). ---
    x32 = x.astype(jnp.float32)
    w32 = w.astype(jnp.float32)
    # 1/max(||row||, eps) == rsqrt(max(sum_sq, eps^2)).
    inv_x = lax.rsqrt(jnp.maximum(jnp.sum(x32 * x32, axis=-1, keepdims=True),
                                  EPS * EPS))                                   # (B, 1)
    inv_w = lax.rsqrt(jnp.maximum(jnp.sum(w32 * w32, axis=-1),
                                  EPS * EPS))[None, :]                          # (1, Fout)

    # --- Pad to tile multiples (zeros; padded inv factors are 0 -> padded out is 0).
    Bp, Foutp, Finp = _round_up(B, tm), _round_up(Fout, tn), _round_up(Fin, tk)
    if (Bp, Finp) != (B, Fin):
        x = jnp.pad(x, ((0, Bp - B), (0, Finp - Fin)))
    if (Foutp, Finp) != (Fout, Fin):
        w = jnp.pad(w, ((0, Foutp - Fout), (0, Finp - Fin)))
    if Bp != B:
        inv_x = jnp.pad(inv_x, ((0, Bp - B), (0, 0)))
    if Foutp != Fout:
        inv_w = jnp.pad(inv_w, ((0, 0), (0, Foutp - Fout)))

    # W-stationary-ish loop order: Fout tiles outermost, B tiles, Fin reduction inner.
    grid = (Foutp // tn, Bp // tm, Finp // tk)

    kernel = functools.partial(_normalized_linear_kernel, precision=precision)

    out = pl.pallas_call(
        kernel,
        out_shape=jax.ShapeDtypeStruct((Bp, Foutp), out_dtype),
        grid_spec=pltpu.PrefetchScalarGridSpec(
            num_scalar_prefetch=0,
            grid=grid,
            in_specs=[
                pl.BlockSpec((tm, tk), lambda j, i, k: (i, k)),   # x tile
                pl.BlockSpec((tn, tk), lambda j, i, k: (j, k)),   # W tile
                pl.BlockSpec((tm, 1), lambda j, i, k: (i, 0)),    # 1/||x_row||
                pl.BlockSpec((1, tn), lambda j, i, k: (0, j)),    # 1/||W_row||
            ],
            out_specs=pl.BlockSpec((tm, tn), lambda j, i, k: (i, j)),
            scratch_shapes=[
                pltpu.VMEM((tm, tn), jnp.float32),  # f32 matmul accumulator
            ],
        ),
        compiler_params=pltpu.CompilerParams(
            dimension_semantics=("parallel", "parallel", "arbitrary"),
            vmem_limit_bytes=int(vmem_limit),
        ),
    )(x, w, inv_x, inv_w)

    if (Bp, Foutp) != (B, Fout):
        out = out[:B, :Fout]
    return out


def xavier_uniform(key, out_features, in_features, dtype=jnp.float32):
    # Matches nn.init.xavier_uniform_: U(-a, a), a = sqrt(6 / (fan_in + fan_out)).
    bound = math.sqrt(6.0 / (in_features + out_features))
    return jax.random.uniform(
        key, (out_features, in_features), dtype=dtype, minval=-bound, maxval=bound
    )


def _reference(x, w):
    x32 = x.astype(jnp.float32)
    w32 = w.astype(jnp.float32)
    xr = x32 / jnp.maximum(jnp.linalg.norm(x32, axis=-1, keepdims=True), EPS)
    wr = w32 / jnp.maximum(jnp.linalg.norm(w32, axis=-1, keepdims=True), EPS)
    return jnp.dot(xr, wr.T, precision=jax.lax.Precision.HIGHEST)


if __name__ == "__main__":
    key = jax.random.PRNGKey(0)
    k1, k2, k3, k4 = jax.random.split(key, 4)

    # Case 1: toy shapes, auto-picked tiles (single grid step after padding).
    B1, Fin1, Fout1 = 8, 32, 16
    x1 = jax.random.normal(k1, (B1, Fin1), dtype=jnp.float32)
    w1 = xavier_uniform(k2, Fout1, Fin1)
    out1 = normalized_linear(x1, w1)
    jax.block_until_ready(out1)
    assert out1.shape == (B1, Fout1)
    assert jnp.allclose(out1, _reference(x1, w1), atol=1e-4, rtol=1e-4), "case 1 mismatch"

    # Case 2: explicit small tiles -> multi-tile grid (3 Fout-tiles x 2 B-tiles x 2
    # K-steps) to exercise accumulator init/finalize and the pipelined K reduction.
    B2, Fin2, Fout2 = 16, 256, 384
    x2 = jax.random.normal(k3, (B2, Fin2), dtype=jnp.float32)
    w2 = xavier_uniform(k4, Fout2, Fin2)
    out2 = normalized_linear(x2, w2, tm=8, tn=128, tk=128)
    jax.block_until_ready(out2)
    assert out2.shape == (B2, Fout2)
    assert jnp.allclose(out2, _reference(x2, w2), atol=1e-4, rtol=1e-4), "case 2 mismatch"

    # Case 3: bf16 inputs, auto tiles (bf16 MXU operands, f32 accumulation/norms).
    k5, k6 = jax.random.split(jax.random.PRNGKey(1), 2)
    B3, Fin3, Fout3 = 32, 512, 1024
    x3 = jax.random.normal(k5, (B3, Fin3), dtype=jnp.float32).astype(jnp.bfloat16)
    w3 = xavier_uniform(k6, Fout3, Fin3).astype(jnp.bfloat16)
    out3 = normalized_linear(x3, w3)
    jax.block_until_ready(out3)
    assert out3.shape == (B3, Fout3)
    assert jnp.allclose(out3.astype(jnp.float32), _reference(x3, w3),
                        atol=2e-2, rtol=2e-2), "case 3 mismatch"

    print("KERNEL_OK")
</pallas_src>

<mosaic_0001>
module attributes {stable_mosaic.version = 11 : i64} {
  func.func @_normalized_linear_kernel(%arg0: i32, %arg1: i32, %arg2: i32, %arg3: memref<8x128xf32, #tpu.memory_space<vmem>>, %arg4: memref<128x128xf32, #tpu.memory_space<vmem>>, %arg5: memref<8x1xf32, #tpu.memory_space<vmem>>, %arg6: memref<1x128xf32, #tpu.memory_space<vmem>>, %arg7: memref<8x128xf32, #tpu.memory_space<vmem>>, %arg8: memref<8x128xf32, #tpu.memory_space<vmem>>) attributes {dimension_semantics = [#tpu.dimension_semantics<parallel>, #tpu.dimension_semantics<parallel>, #tpu.dimension_semantics<arbitrary>], iteration_bounds = array<i64: 1, 1, 1>, scalar_prefetch = 0 : i64, scratch_operands = 1 : i64, tpu.core_type = #tpu.core_type<tc>, window_params = [{transform_indices = @transform_0, window_bounds = array<i64: 8, 128>}, {transform_indices = @transform_1, window_bounds = array<i64: 128, 128>}, {transform_indices = @transform_2, window_bounds = array<i64: 8, 1>}, {transform_indices = @transform_3, window_bounds = array<i64: 1, 128>}, {transform_indices = @transform_4, window_bounds = array<i64: 8, 128>}]} {
    %c0_i32 = arith.constant 0 : i32
    %0 = arith.cmpi eq, %arg2, %c0_i32 : i32
    %1 = arith.extui %0 : i1 to i32
    %c0_i32_0 = arith.constant 0 : i32
    %2 = arith.cmpi ne, %1, %c0_i32_0 : i32
    scf.if %2 {
      %cst_10 = arith.constant 0.000000e+00 : f32
      %12 = vector.broadcast %cst_10 : f32 to vector<8x128xf32>
      %c0_11 = arith.constant 0 : index
      %c0_12 = arith.constant 0 : index
      %13 = vector.load %arg8[%c0_11, %c0_12] : memref<8x128xf32, #tpu.memory_space<vmem>>, vector<8x128xf32>
      tpu.vector_store %arg8[%c0_11, %c0_12], %12 {strides = array<i32>} : memref<8x128xf32, #tpu.memory_space<vmem>>, vector<8x128xf32>,
    } else {
    }
    %c0 = arith.constant 0 : index
    %c0_1 = arith.constant 0 : index
    %3 = vector.load %arg8[%c0, %c0_1] : memref<8x128xf32, #tpu.memory_space<vmem>>, vector<8x128xf32>
    %c0_2 = arith.constant 0 : index
    %c0_3 = arith.constant 0 : index
    %4 = vector.load %arg3[%c0_2, %c0_3] : memref<8x128xf32, #tpu.memory_space<vmem>>, vector<8x128xf32>
    %c0_4 = arith.constant 0 : index
    %c0_5 = arith.constant 0 : index
    %5 = vector.load %arg4[%c0_4, %c0_5] : memref<128x128xf32, #tpu.memory_space<vmem>>, vector<128x128xf32>
    %cst = arith.constant dense<0.000000e+00> : vector<8x128xf32>
    %6 = tpu.matmul %4, %5, %cst {dimension_numbers = #tpu.dot_dimension_numbers<[1], [1], [0], [0], [0, 0, 1, 0], [], []>} : vector<8x128xf32>, vector<128x128xf32>, vector<8x128xf32> -> vector<8x128xf32>
    %7 = arith.addf %3, %6 : vector<8x128xf32>
    %c0_6 = arith.constant 0 : index
    %c0_7 = arith.constant 0 : index
    %8 = vector.load %arg8[%c0_6, %c0_7] : memref<8x128xf32, #tpu.memory_space<vmem>>, vector<8x128xf32>
    tpu.vector_store %arg8[%c0_6, %c0_7], %7 {strides = array<i32>} : memref<8x128xf32, #tpu.memory_space<vmem>>, vector<8x128xf32>,
    %c0_i32_8 = arith.constant 0 : i32
    %9 = arith.cmpi eq, %arg2, %c0_i32_8 : i32
    %10 = arith.extui %9 : i1 to i32
    %c0_i32_9 = arith.constant 0 : i32
    %11 = arith.cmpi ne, %10, %c0_i32_9 : i32
    scf.if %11 {
      %c0_10 = arith.constant 0 : index
      %c0_11 = arith.constant 0 : index
      %12 = vector.load %arg8[%c0_10, %c0_11] : memref<8x128xf32, #tpu.memory_space<vmem>>, vector<8x128xf32>
      %c0_12 = arith.constant 0 : index
      %c0_13 = arith.constant 0 : index
      %13 = vector.load %arg5[%c0_12, %c0_13] : memref<8x1xf32, #tpu.memory_space<vmem>>, vector<8x1xf32>
      %14 = vector.broadcast %13 : vector<8x1xf32> to vector<8x128xf32>
      %15 = arith.mulf %12, %14 : vector<8x128xf32>
      %c0_14 = arith.constant 0 : index
      %c0_15 = arith.constant 0 : index
      %16 = vector.load %arg6[%c0_14, %c0_15] : memref<1x128xf32, #tpu.memory_space<vmem>>, vector<1x128xf32>
      %17 = vector.broadcast %16 : vector<1x128xf32> to vector<8x128xf32>
      %18 = arith.mulf %15, %17 : vector<8x128xf32>
      %c0_16 = arith.constant 0 : index
      %c0_17 = arith.constant 0 : index
      %19 = vector.load %arg7[%c0_16, %c0_17] : memref<8x128xf32, #tpu.memory_space<vmem>>, vector<8x128xf32>
      tpu.vector_store %arg7[%c0_16, %c0_17], %18 {strides = array<i32>} : memref<8x128xf32, #tpu.memory_space<vmem>>, vector<8x128xf32>,
    } else {
    }
    return
  }
  func.func @transform_0(%arg0: i32, %arg1: i32, %arg2: i32) -> (i32, i32) {
    %c0_i32 = arith.constant 0 : i32
    return %arg1, %arg2 : i32, i32
  }
  func.func @transform_1(%arg0: i32, %arg1: i32, %arg2: i32) -> (i32, i32) {
    %c0_i32 = arith.constant 0 : i32
    return %arg0, %arg2 : i32, i32
  }
  func.func @transform_2(%arg0: i32, %arg1: i32, %arg2: i32) -> (i32, i32) {
    %c0_i32 = arith.constant 0 : i32
    %c0_i32_0 = arith.constant 0 : i32
    return %arg1, %c0_i32 : i32, i32
  }
  func.func @transform_3(%arg0: i32, %arg1: i32, %arg2: i32) -> (i32, i32) {
    %c0_i32 = arith.constant 0 : i32
    %c0_i32_0 = arith.constant 0 : i32
    return %c0_i32, %arg0 : i32, i32
  }
  func.func @transform_4(%arg0: i32, %arg1: i32, %arg2: i32) -> (i32, i32) {
    %c0_i32 = arith.constant 0 : i32
    return %arg1, %arg0 : i32, i32
  }
}

</mosaic_0001>

<llo_original>
// kernel: normalized_linear.1
$region0: #{normalized_linear.1}
  #allocation0 [shape = 'u32[]', space=smem, size = 0x4, offset = 0x4, fixed_abs, tag = 'smem constant byte address 0x4 - core index']
  #allocation1 [shape = 'u32[144,128]{1,0:T(1,128)}', space=vmem, size = 0x12000, scoped, tag = 'internal scratch']
  #allocation2 [shape = 'f32[8,128]{1,0:T(8,128)}', space=vmem, size = 0x1000, scoped, tag = 'scratch operand']
  %s0 = inlined_call_operand.vmem [shape: f32[8,128], index: 0, kind: input, shape index: {}]
  %s1 = inlined_call_operand.vmem [shape: f32[128,128], index: 1, kind: input, shape index: {}]
  %s2 = inlined_call_operand.vmem [shape: f32[8,1], index: 2, kind: input, shape index: {}]
  %s3 = inlined_call_operand.vmem [shape: f32[1,128], index: 3, kind: input, shape index: {}]
  %s4 = inlined_call_operand.hbm [shape: f32[8,128], index: 4, kind: output, shape index: {}]
  %s5 = sld [smem:[#allocation0]]
  $region34: #{normalized_linear.1} parent=0
    _
  %s7 = ssub.s32 1, %s5
  %s8 = scalar_select 0, %s7, %s5
  $region1: #{normalized_linear.1} parent=0
    #allocation3 [shape = 'u8[4096]{0}', space=vmem, size = 0x1000, scoped, tag = 'output window, operand 0, single buffered']
    #allocation4 [shape = 's32[1]{0}', space=sflag, size = 0x4, scoped, tag = 'scoped memory for normalized_linear.1']
    %9 = vsyncpa [#allocation4], 0
    // Predicated region
    $region2: #{normalized_linear.1} parent=1 // pred_check
      _
    $region3: #{normalized_linear.1} parent=1 // pred_check_branch
      %11 = sbr.rel (0) target = $region5
    $region4: #{normalized_linear.1} parent=1 // pred_region
      _
    $region5: #{normalized_linear.1} parent=1 // pred_fallthru
      _
    // Predicated region
    $region6: #{normalized_linear.1} parent=1 // pred_check
      _
    $region7: #{normalized_linear.1} parent=1 // pred_check_branch
      %13 = sbr.rel (0) target = $region9
    $region8: #{normalized_linear.1} parent=1 // pred_region
      _
    $region9: #{normalized_linear.1} parent=1 // pred_fallthru
      _
    // Predicated region
    $region10: #{normalized_linear.1} parent=1 // pred_check
      _
    $region11: #{normalized_linear.1} parent=1 // pred_check_branch
      %15 = sbr.rel (0) target = $region13
    $region12: #{normalized_linear.1} parent=1 // pred_region
      _
    $region13: #{normalized_linear.1} parent=1 // pred_fallthru
      _
    // Predicated region
    $region14: #{normalized_linear.1} parent=1 // pred_check
      _
    $region15: #{normalized_linear.1} parent=1 // pred_check_branch
      %17 = sbr.rel (0) target = $region17
    $region16: #{normalized_linear.1} parent=1 // pred_region
      _
    $region17: #{normalized_linear.1} parent=1 // pred_fallthru
      _
    %p18 = scmp.eq.s32.totalorder 0, 0
    // Predicated region
    $region18: #{normalized_linear.1} parent=1 // pred_check
      %p19 = pneg %p18
    $region19: #{normalized_linear.1} parent=1 // pred_check_branch
      %21 = sbr.rel (%p19) target = $region21
    $region20: #{normalized_linear.1} parent=1 // pred_region
      %22 = vst [vmem:[#allocation2] sm:$0xff] 0.0
    $region21: #{normalized_linear.1} parent=1 // pred_fallthru
      _
    %v23 = vld [vmem:[#allocation2] sm:$0xff]
    %v24 = vld [vmem:[%s0] sm:$0xff]
    %v25 = vld [vmem:[%s1] sm:$0xff]
    %v26 = vld [vmem:[%s1 + $0x8] sm:$0xff]
    %v27 = vld [vmem:[%s1 + $0x10] sm:$0xff]
    %v28 = vld [vmem:[%s1 + $0x18] sm:$0xff]
    %v29 = vld [vmem:[%s1 + $0x20] sm:$0xff]
    %v30 = vld [vmem:[%s1 + $0x28] sm:$0xff]
    %v31 = vld [vmem:[%s1 + $0x30] sm:$0xff]
    %v32 = vld [vmem:[%s1 + $0x38] sm:$0xff]
    %v33 = vld [vmem:[%s1 + $0x40] sm:$0xff]
    %v34 = vld [vmem:[%s1 + $0x48] sm:$0xff]
    %v35 = vld [vmem:[%s1 + $0x50] sm:$0xff]
    %v36 = vld [vmem:[%s1 + $0x58] sm:$0xff]
    %v37 = vld [vmem:[%s1 + $0x60] sm:$0xff]
    %v38 = vld [vmem:[%s1 + $0x68] sm:$0xff]
    %v39 = vld [vmem:[%s1 + $0x70] sm:$0xff]
    %v40 = vld [vmem:[%s1 + $0x78] sm:$0xff]
    %41 = vmatprep.subr.mxu0 0.0
    %42 = vmatpush1.xpose.msra.mxu0 %v40
    %43 = vmatprep.subr.mxu0 0.0
    %44 = vmatpush1.xpose.msra.mxu0 %v39
    %45 = vmatprep.subr.mxu0 0.0
    %46 = vmatpush1.xpose.msra.mxu0 %v38
    %47 = vmatprep.subr.mxu0 0.0
    %48 = vmatpush1.xpose.msra.mxu0 %v37
    %49 = vmatprep.subr.mxu0 0.0
    %50 = vmatpush1.xpose.msra.mxu0 %v36
    %51 = vmatprep.subr.mxu0 0.0
    %52 = vmatpush1.xpose.msra.mxu0 %v35
    %53 = vmatprep.subr.mxu0 0.0
    %54 = vmatpush1.xpose.msra.mxu0 %v34
    %55 = vmatprep.subr.mxu0 0.0
    %56 = vmatpush1.xpose.msra.mxu0 %v33
    %57 = vmatprep.subr.mxu0 0.0
    %58 = vmatpush1.xpose.msra.mxu0 %v32
    %59 = vmatprep.subr.mxu0 0.0
    %60 = vmatpush1.xpose.msra.mxu0 %v31
    %61 = vmatprep.subr.mxu0 0.0
    %62 = vmatpush1.xpose.msra.mxu0 %v30
    %63 = vmatprep.subr.mxu0 0.0
    %64 = vmatpush1.xpose.msra.mxu0 %v29
    %65 = vmatprep.subr.mxu0 0.0
    %66 = vmatpush1.xpose.msra.mxu0 %v28
    %67 = vmatprep.subr.mxu0 0.0
    %68 = vmatpush1.xpose.msra.mxu0 %v27
    %69 = vmatprep.subr.mxu0 0.0
    %70 = vmatpush1.xpose.msra.mxu0 %v26
    %71 = vmatprep.subr.mxu0 0.0
    %72 = vmatpush1.xpose.msra.mxu0 %v25
    %73 = vmatprep.subr.mxu0 0.0
    %74 = vmatpush2.xpose.msra.mxu0 0.0
    %75 = vmatprep.subr.mxu0 0.0
    %76 = vmatpush2.xpose.msra.mxu0 0.0
    %77 = vmatprep.subr.mxu0 0.0
    %78 = vmatpush2.xpose.msra.mxu0 0.0
    %79 = vmatprep.subr.mxu0 0.0
    %80 = vmatpush2.xpose.msra.mxu0 0.0
    %81 = vmatprep.subr.mxu0 0.0
    %82 = vmatpush2.xpose.msra.mxu0 0.0
    %83 = vmatprep.subr.mxu0 0.0
    %84 = vmatpush2.xpose.msra.mxu0 0.0
    %85 = vmatprep.subr.mxu0 0.0
    %86 = vmatpush2.xpose.msra.mxu0 0.0
    %87 = vmatprep.subr.mxu0 0.0
    %88 = vmatpush2.xpose.msra.mxu0 0.0
    %89 = vmatprep.subr.mxu0 0.0
    %90 = vmatpush2.xpose.msra.mxu0 0.0
    %91 = vmatprep.subr.mxu0 0.0
    %92 = vmatpush2.xpose.msra.mxu0 0.0
    %93 = vmatprep.subr.mxu0 0.0
    %94 = vmatpush2.xpose.msra.mxu0 0.0
    %95 = vmatprep.subr.mxu0 0.0
    %96 = vmatpush2.xpose.msra.mxu0 0.0
    %97 = vmatprep.subr.mxu0 0.0
    %98 = vmatpush2.xpose.msra.mxu0 0.0
    %99 = vmatprep.subr.mxu0 0.0
    %100 = vmatpush2.xpose.msra.mxu0 0.0
    %101 = vmatprep.subr.mxu0 0.0
    %102 = vmatpush2.xpose.msra.mxu0 0.0
    %103 = vmatprep.subr.mxu0 0.0
    %104 = vmatpush2.xpose.msra.mxu0 0.0
    %105 = vmatprep.mubr.f32.mxu0 0.0
    %106 = vmatmul.mubr.f32.gmra.mxu0 %v24
    %v107 = vpop.f32.mrf.mxu0
    %v108 = vadd.f32 0.0, %v107
    %v109 = vpop.f32.mrf.mxu0
    %110 = vdwg.mxu0
    %v111 = vadd.f32 %v23, %v108
    %112 = vst [vmem:[#allocation2] sm:$0xff] %v111
    // Predicated region
    $region22: #{normalized_linear.1} parent=1 // pred_check
      %p113 = pneg %p18
    $region23: #{normalized_linear.1} parent=1 // pred_check_branch
      %115 = sbr.rel (%p113) target = $region25
    $region24: #{normalized_linear.1} parent=1 // pred_region
      %v116 = vld [vmem:[#allocation2] sm:$0xff]
      %v117 = vld [vmem:[%s2] sm:$0xff]
      %119 = vset.pattern.permute.xlu0 0
      %120 = vperm.xlu0 %119, %v117
      %v121 = vpop.permute.xlu0 %120
      %v123 = vmul.f32 %v116, %v121
      %v124 = vld [vmem:[%s3] sm:$0x1]
      %v126 = vlaneseq
      %v127 = vshrl.u32 %v126, 7
      %v128 = vsub.s32 0, %v127
      %v129 = vrot.slane %v124, %v128
      %v131 = vmul.f32 %v123, %v129
      %132 = vst [vmem:[#allocation3] sm:$0xff] %v131
    $region25: #{normalized_linear.1} parent=1 // pred_fallthru
      _
    // Predicated region
    $region26: #{normalized_linear.1} parent=1 // pred_check
      _
    $region27: #{normalized_linear.1} parent=1 // pred_check_branch
      %134 = sbr.rel (0) target = $region29
    $region28: #{normalized_linear.1} parent=1 // pred_region
      %s136 = ssub.s32 128, 128
      %137 = vsyncadd [#allocation4], %s136
      %s139 = sshll.u32 [#allocation3], 4
      %s140 = int_to_ptr.vmem [resolvable:$true] %s139
      %142 = dma.vmem_to_hbm [thread:$0]  %s140, 128, %s4, [#allocation4]
    $region29: #{normalized_linear.1} parent=1 // pred_fallthru
      _
    // Predicated region
    $region30: #{normalized_linear.1} parent=1 // pred_check
      _
    $region31: #{normalized_linear.1} parent=1 // pred_check_branch
      %144 = sbr.rel (0) target = $region33
    $region32: #{normalized_linear.1} parent=1 // pred_region
      %145 = dma.done [#allocation4], 128
    $region33: #{normalized_linear.1} parent=1 // pred_fallthru
      _
    %146 = vsyncpa [#allocation4], 1

</llo_original>
